<compile_context>
chip_gen: v7x
topology: tpu7x:2x2x1
jax: 0.10.0
libtpu: 0.0.40
codegen_flags: <defaults>
</compile_context>

<pallas_src>
import functools

import jax
import jax.numpy as jnp
import numpy as np
from jax.experimental import pallas as pl
from jax.experimental.pallas import tpu as pltpu


# ----------------------------------------------------------------------------
# helpers
# ----------------------------------------------------------------------------
def _round_up(x, m):
    return ((x + m - 1) // m) * m


def _pad_to(a, shape):
    pads = [(0, t - s) for s, t in zip(a.shape, shape)]
    if any(p[1] for p in pads):
        return jnp.pad(a, pads)
    return a


# ----------------------------------------------------------------------------
# K-tiled linear kernel (single concatenated/contiguous input)
# ----------------------------------------------------------------------------
def _tiled_linear_kernel(x_ref, w_ref, b_ref, o_ref, acc_ref):
    k = pl.program_id(2)

    @pl.when(k == 0)
    def _init():
        acc_ref[...] = jnp.zeros_like(acc_ref)

    acc_ref[...] += jnp.dot(
        x_ref[...], w_ref[...], preferred_element_type=jnp.float32
    )

    # Bias only in the epilogue (correct with a persistent accumulator, and free
    # under the MXU).
    @pl.when(k == pl.num_programs(2) - 1)
    def _finalize():
        o_ref[...] = (acc_ref[...] + b_ref[...]).astype(o_ref.dtype)


def _linear_tiled(x, w_t, b, *, mxu_dtype=jnp.bfloat16, tiles=None):
    """y = x @ w_t + b with an (M, N, K) tiled grid and f32 accumulator."""
    m, k = x.shape
    k_w, n = w_t.shape
    assert k == k_w, f"feature mismatch: {k} vs {k_w}"
    out_dtype = x.dtype

    # Lane-dense output: pad out_dim to a multiple of 128.
    n_pad = _round_up(n, 128)
    if tiles is not None:
        tm, tn, tk = tiles
    else:
        # Conservative tile sizes: fit the scoped VMEM default on v5e/v6e/v7x,
        # 128/256-aligned for the MXU.  (For very large shapes, bump to
        # tm=tn=512 on v6e and raise vmem_limit_bytes.)
        tm = m if m <= 256 else 256
        tn = 256 if (n_pad % 256 == 0) else 128
        tk = k if k <= 512 else 512
    m_pad = _round_up(m, tm)
    k_pad = _round_up(k, tk)
    n_pad = _round_up(n_pad, tn)

    # bf16 operands for the MXU; zero padding keeps the math exact.
    x_p = _pad_to(x, (m_pad, k_pad)).astype(mxu_dtype)
    w_p = _pad_to(w_t, (k_pad, n_pad)).astype(mxu_dtype)
    b_p = _pad_to(b.reshape(1, n), (1, n_pad)).astype(jnp.float32)

    grid = (m_pad // tm, n_pad // tn, k_pad // tk)
    out = pl.pallas_call(
        _tiled_linear_kernel,
        out_shape=jax.ShapeDtypeStruct((m_pad, n_pad), out_dtype),
        grid_spec=pltpu.PrefetchScalarGridSpec(
            num_scalar_prefetch=0,
            grid=grid,
            in_specs=[
                pl.BlockSpec((tm, tk), lambda i, j, kk: (i, kk)),
                pl.BlockSpec((tk, tn), lambda i, j, kk: (kk, j)),
                pl.BlockSpec((1, tn), lambda i, j, kk: (0, j)),
            ],
            out_specs=pl.BlockSpec((tm, tn), lambda i, j, kk: (i, j)),
            scratch_shapes=[pltpu.VMEM((tm, tn), jnp.float32)],
        ),
        compiler_params=pltpu.CompilerParams(
            # M/N parallel (megacore / dual TC on v7x), reduction axis arbitrary.
            dimension_semantics=("parallel", "parallel", "arbitrary"),
        ),
    )(x_p, w_p, b_p)
    return out[:m, :n]


# ----------------------------------------------------------------------------
# fused-concat linear kernel (list of inputs, no HBM concat round trip)
# ----------------------------------------------------------------------------
def _make_fused_kernel(num_chunks):
    def kernel(*args):
        x_refs = args[:num_chunks]
        w_refs = args[num_chunks : 2 * num_chunks]
        b_ref = args[2 * num_chunks]
        o_ref = args[2 * num_chunks + 1]
        acc = jnp.dot(
            x_refs[0][...], w_refs[0][...], preferred_element_type=jnp.float32
        )
        for c in range(1, num_chunks):
            acc += jnp.dot(
                x_refs[c][...], w_refs[c][...], preferred_element_type=jnp.float32
            )
        o_ref[...] = (acc + b_ref[...]).astype(o_ref.dtype)

    return kernel


def _linear_fused_concat(xs, w_t, b, *, mxu_dtype=jnp.bfloat16):
    """y = concat(xs, -1) @ w_t + b without materializing the concat in HBM.

    Each input chunk is a separate pallas_call operand; W is split along K to
    match and all partial matmuls accumulate in f32 inside one kernel step.
    """
    m = xs[0].shape[0]
    dims = [int(x.shape[1]) for x in xs]
    k_total = int(sum(dims))
    k_w, n = w_t.shape
    assert k_w == k_total, f"feature mismatch: {k_total} vs {k_w}"
    out_dtype = xs[0].dtype

    n_pad = _round_up(n, 128)
    tn = 256 if (n_pad % 256 == 0) else 128
    n_pad = _round_up(n_pad, tn)
    tm = m if m <= 256 else 256
    m_pad = _round_up(m, tm)

    # Per-step VMEM estimate (double-buffered inputs + output + bias).  If the
    # full-K chunk blocks would not fit, fall back to the K-tiled path.
    bpe = jnp.dtype(mxu_dtype).itemsize
    per_step = 2 * bpe * (tm * k_total + k_total * tn) + 2 * 4 * (tm * tn + tn)
    if per_step > 12 * 1024 * 1024:
        return _linear_tiled(
            jnp.concatenate(list(xs), axis=-1), w_t, b, mxu_dtype=mxu_dtype
        )

    # Split the weight along K to match the input chunks (weights are small
    # relative to the activation stream we avoid re-reading).
    offs = np.cumsum([0] + dims)
    w_chunks = [w_t[offs[c] : offs[c + 1], :] for c in range(len(dims))]

    x_args = [_pad_to(x, (m_pad, d)).astype(mxu_dtype) for x, d in zip(xs, dims)]
    w_args = [
        _pad_to(w, (d, n_pad)).astype(mxu_dtype) for w, d in zip(w_chunks, dims)
    ]
    b_p = _pad_to(b.reshape(1, n), (1, n_pad)).astype(jnp.float32)

    in_specs = (
        [pl.BlockSpec((tm, d), lambda i, j: (i, 0)) for d in dims]
        + [pl.BlockSpec((d, tn), lambda i, j: (0, j)) for d in dims]
        + [pl.BlockSpec((1, tn), lambda i, j: (0, j))]
    )
    grid = (m_pad // tm, n_pad // tn)
    out = pl.pallas_call(
        _make_fused_kernel(len(xs)),
        out_shape=jax.ShapeDtypeStruct((m_pad, n_pad), out_dtype),
        grid_spec=pltpu.PrefetchScalarGridSpec(
            num_scalar_prefetch=0,
            grid=grid,
            in_specs=in_specs,
            out_specs=pl.BlockSpec((tm, tn), lambda i, j: (i, j)),
        ),
        compiler_params=pltpu.CompilerParams(
            dimension_semantics=("parallel", "parallel"),
        ),
    )(*x_args, *w_args, b_p)
    return out[:m, :n]


# ----------------------------------------------------------------------------
# public API
# ----------------------------------------------------------------------------
def mlpnet_forward(inputs, w_t, b, *, mxu_dtype=jnp.bfloat16, tiles=None):
    """Forward pass of MLPNet.

    inputs : [N, D] array, or list of [N, D_i] arrays (logical concat on last axis)
    w_t    : [sum(D_i), output_dim]   (transposed PyTorch Linear weight)
    b      : [output_dim]
    """
    if isinstance(inputs, (list, tuple)):
        xs = list(inputs)
        if len(xs) == 1:
            return _linear_tiled(xs[0], w_t, b, mxu_dtype=mxu_dtype, tiles=tiles)
        return _linear_fused_concat(xs, w_t, b, mxu_dtype=mxu_dtype)
    return _linear_tiled(inputs, w_t, b, mxu_dtype=mxu_dtype, tiles=tiles)


def init_mlpnet_params(key, input_dims, output_dim, dtype=jnp.float32):
    """Deterministic init mimicking nn.Linear default (uniform +/- 1/sqrt(fan_in))."""
    input_dim = int(np.sum(input_dims))
    k_w, k_b = jax.random.split(key)
    bound = 1.0 / np.sqrt(input_dim)
    # PyTorch weight is [output_dim, input_dim]; store transposed [input_dim, output_dim].
    w_t = jax.random.uniform(
        k_w, (input_dim, output_dim), dtype=dtype, minval=-bound, maxval=bound
    )
    b = jax.random.uniform(
        k_b, (output_dim,), dtype=dtype, minval=-bound, maxval=bound
    )
    return w_t, b


# TODO(synk): at truly tiny production shapes (batch~8, D~32) a plain XLA
# x @ W + b fusion beats any pallas_call dispatch; this kernel targets the
# case where the layer is applied to large node batches.

if __name__ == "__main__":
    key = jax.random.PRNGKey(0)
    k_in1, k_in2, k_param, k_x, k_param2 = jax.random.split(key, 5)

    # ---- Test 1: list of inputs (fused concat path), matching the module demo.
    batch = 8
    input_dims = (16, 16)  # concat -> 32 features
    output_dim = 64

    x1 = jax.random.normal(k_in1, (batch, input_dims[0]), dtype=jnp.float32)
    x2 = jax.random.normal(k_in2, (batch, input_dims[1]), dtype=jnp.float32)
    w_t, b = init_mlpnet_params(k_param, input_dims, output_dim)

    y = mlpnet_forward([x1, x2], w_t, b)
    y = jax.block_until_ready(y)

    x_cat = jnp.concatenate([x1, x2], axis=-1)
    y_ref = x_cat @ w_t + b
    # bf16 MXU operands with f32 accumulation -> loose tolerance vs f32 reference.
    np.testing.assert_allclose(np.asarray(y), np.asarray(y_ref), rtol=5e-2, atol=5e-2)

    # ---- Test 2: single tensor, K-tiled accumulator path (2 K-steps forced).
    m2, k2, n2 = 16, 256, 64
    x_single = jax.random.normal(k_x, (m2, k2), dtype=jnp.float32)
    w_t2, b2 = init_mlpnet_params(k_param2, (k2,), n2)

    y2 = mlpnet_forward(x_single, w_t2, b2, tiles=(16, 128, 128))
    y2 = jax.block_until_ready(y2)

    y2_ref = x_single @ w_t2 + b2
    np.testing.assert_allclose(np.asarray(y2), np.asarray(y2_ref), rtol=5e-2, atol=5e-2)

    print("KERNEL_OK")
</pallas_src>

<mosaic_0001>
module attributes {stable_mosaic.version = 11 : i64} {
  func.func @kernel(%arg0: i32, %arg1: i32, %arg2: memref<8x16xbf16, #tpu.memory_space<vmem>>, %arg3: memref<8x16xbf16, #tpu.memory_space<vmem>>, %arg4: memref<16x128xbf16, #tpu.memory_space<vmem>>, %arg5: memref<16x128xbf16, #tpu.memory_space<vmem>>, %arg6: memref<1x128xf32, #tpu.memory_space<vmem>>, %arg7: memref<8x128xf32, #tpu.memory_space<vmem>>) attributes {dimension_semantics = [#tpu.dimension_semantics<parallel>, #tpu.dimension_semantics<parallel>], iteration_bounds = array<i64: 1, 1>, scalar_prefetch = 0 : i64, scratch_operands = 0 : i64, tpu.core_type = #tpu.core_type<tc>, window_params = [{transform_indices = @transform_0, window_bounds = array<i64: 8, 16>}, {transform_indices = @transform_1, window_bounds = array<i64: 8, 16>}, {transform_indices = @transform_2, window_bounds = array<i64: 16, 128>}, {transform_indices = @transform_3, window_bounds = array<i64: 16, 128>}, {transform_indices = @transform_4, window_bounds = array<i64: 1, 128>}, {transform_indices = @transform_5, window_bounds = array<i64: 8, 128>}]} {
    %c0 = arith.constant 0 : index
    %c0_0 = arith.constant 0 : index
    %0 = vector.load %arg2[%c0, %c0_0] : memref<8x16xbf16, #tpu.memory_space<vmem>>, vector<8x16xbf16>
    %c0_1 = arith.constant 0 : index
    %c0_2 = arith.constant 0 : index
    %1 = vector.load %arg4[%c0_1, %c0_2] : memref<16x128xbf16, #tpu.memory_space<vmem>>, vector<16x128xbf16>
    %cst = arith.constant dense<0.000000e+00> : vector<8x128xf32>
    %2 = tpu.matmul %0, %1, %cst {dimension_numbers = #tpu.dot_dimension_numbers<[1], [0], [0], [1], [0, 0, 1, 1], [], []>} : vector<8x16xbf16>, vector<16x128xbf16>, vector<8x128xf32> -> vector<8x128xf32>
    %c0_3 = arith.constant 0 : index
    %c0_4 = arith.constant 0 : index
    %3 = vector.load %arg3[%c0_3, %c0_4] : memref<8x16xbf16, #tpu.memory_space<vmem>>, vector<8x16xbf16>
    %c0_5 = arith.constant 0 : index
    %c0_6 = arith.constant 0 : index
    %4 = vector.load %arg5[%c0_5, %c0_6] : memref<16x128xbf16, #tpu.memory_space<vmem>>, vector<16x128xbf16>
    %cst_7 = arith.constant dense<0.000000e+00> : vector<8x128xf32>
    %5 = tpu.matmul %3, %4, %cst_7 {dimension_numbers = #tpu.dot_dimension_numbers<[1], [0], [0], [1], [0, 0, 1, 1], [], []>} : vector<8x16xbf16>, vector<16x128xbf16>, vector<8x128xf32> -> vector<8x128xf32>
    %6 = arith.addf %2, %5 : vector<8x128xf32>
    %c0_8 = arith.constant 0 : index
    %c0_9 = arith.constant 0 : index
    %7 = vector.load %arg6[%c0_8, %c0_9] : memref<1x128xf32, #tpu.memory_space<vmem>>, vector<1x128xf32>
    %8 = vector.broadcast %7 : vector<1x128xf32> to vector<8x128xf32>
    %9 = arith.addf %6, %8 : vector<8x128xf32>
    %c0_10 = arith.constant 0 : index
    %c0_11 = arith.constant 0 : index
    %10 = vector.load %arg7[%c0_10, %c0_11] : memref<8x128xf32, #tpu.memory_space<vmem>>, vector<8x128xf32>
    tpu.vector_store %arg7[%c0_10, %c0_11], %9 {strides = array<i32>} : memref<8x128xf32, #tpu.memory_space<vmem>>, vector<8x128xf32>,
    return
  }
  func.func @transform_0(%arg0: i32, %arg1: i32) -> (i32, i32) {
    %c0_i32 = arith.constant 0 : i32
    %c0_i32_0 = arith.constant 0 : i32
    return %arg0, %c0_i32 : i32, i32
  }
  func.func @transform_1(%arg0: i32, %arg1: i32) -> (i32, i32) {
    %c0_i32 = arith.constant 0 : i32
    %c0_i32_0 = arith.constant 0 : i32
    return %arg0, %c0_i32 : i32, i32
  }
  func.func @transform_2(%arg0: i32, %arg1: i32) -> (i32, i32) {
    %c0_i32 = arith.constant 0 : i32
    %c0_i32_0 = arith.constant 0 : i32
    return %c0_i32, %arg1 : i32, i32
  }
  func.func @transform_3(%arg0: i32, %arg1: i32) -> (i32, i32) {
    %c0_i32 = arith.constant 0 : i32
    %c0_i32_0 = arith.constant 0 : i32
    return %c0_i32, %arg1 : i32, i32
  }
  func.func @transform_4(%arg0: i32, %arg1: i32) -> (i32, i32) {
    %c0_i32 = arith.constant 0 : i32
    %c0_i32_0 = arith.constant 0 : i32
    return %c0_i32, %arg1 : i32, i32
  }
  func.func @transform_5(%arg0: i32, %arg1: i32) -> (i32, i32) {
    %c0_i32 = arith.constant 0 : i32
    return %arg0, %arg1 : i32, i32
  }
}

</mosaic_0001>

<llo_original>
// kernel: tpu_custom_call.1
$region0: #{tpu_custom_call.1}
  #allocation0 [shape = 'u32[]', space=smem, size = 0x4, offset = 0x4, fixed_abs, tag = 'smem constant byte address 0x4 - core index']
  #allocation1 [shape = 'u32[144,128]{1,0:T(1,128)}', space=vmem, size = 0x12000, scoped, tag = 'internal scratch']
  %s0 = inlined_call_operand.hbm [shape: bf16[8,16], index: 0, kind: input, shape index: {}]
  %s1 = inlined_call_operand.hbm [shape: bf16[8,16], index: 1, kind: input, shape index: {}]
  %s2 = inlined_call_operand.hbm [shape: bf16[16,128], index: 2, kind: input, shape index: {}]
  %s3 = inlined_call_operand.vmem [shape: bf16[16,128], index: 3, kind: input, shape index: {}]
  %s4 = inlined_call_operand.vmem [shape: f32[1,128], index: 4, kind: input, shape index: {}]
  %s5 = inlined_call_operand.hbm [shape: f32[8,128], index: 5, kind: output, shape index: {}]
  %s6 = sld [smem:[#allocation0]]
  $region42: #{tpu_custom_call.1} parent=0
    _
  %s8 = ssub.s32 1, %s6
  %s9 = scalar_select 0, %s8, %s6
  $region1: #{tpu_custom_call.1} parent=0
    #allocation2 [shape = 'u8[2048]{0}', space=vmem, size = 0x800, scoped, tag = 'input window, operand 0, single buffered']
    #allocation3 [shape = 's32[1]{0}', space=sflag, size = 0x4, scoped, tag = 'scoped memory for tpu_custom_call.1']
    #allocation4 [shape = 's32[1]{0}', space=sflag, size = 0x4, scoped, tag = 'scoped memory for tpu_custom_call.1']
    #allocation5 [shape = 'u8[2048]{0}', space=vmem, size = 0x800, scoped, tag = 'input window, operand 1, single buffered']
    #allocation6 [shape = 's32[1]{0}', space=sflag, size = 0x4, scoped, tag = 'scoped memory for tpu_custom_call.1']
    #allocation7 [shape = 'u8[4096]{0}', space=vmem, size = 0x1000, scoped, tag = 'input window, operand 2, single buffered']
    #allocation8 [shape = 'u8[4096]{0}', space=vmem, size = 0x1000, scoped, tag = 'output window, operand 0, single buffered']
    %10 = vsyncpa [#allocation3], 0
    %11 = vsyncpa [#allocation6], 0
    %12 = vsyncpa [#allocation4], 0
    // Predicated region
    $region2: #{tpu_custom_call.1} parent=1 // pred_check
      _
    $region3: #{tpu_custom_call.1} parent=1 // pred_check_branch
      %14 = sbr.rel (0) target = $region5
    $region4: #{tpu_custom_call.1} parent=1 // pred_region
      %s16 = ssub.s32 64, 64
      %17 = vsyncadd [#allocation3], %s16
      %s19 = sshll.u32 [#allocation2], 4
      %s20 = int_to_ptr.vmem [resolvable:$true] %s19
      %22 = dma.hbm_to_vmem [thread:$0]  %s0, 64, %s20, [#allocation3]
    $region5: #{tpu_custom_call.1} parent=1 // pred_fallthru
      _
    // Predicated region
    $region6: #{tpu_custom_call.1} parent=1 // pred_check
      _
    $region7: #{tpu_custom_call.1} parent=1 // pred_check_branch
      %24 = sbr.rel (0) target = $region9
    $region8: #{tpu_custom_call.1} parent=1 // pred_region
      %s26 = ssub.s32 64, 64
      %27 = vsyncadd [#allocation6], %s26
      %s29 = sshll.u32 [#allocation5], 4
      %s30 = int_to_ptr.vmem [resolvable:$true] %s29
      %32 = dma.hbm_to_vmem [thread:$0]  %s1, 64, %s30, [#allocation6]
    $region9: #{tpu_custom_call.1} parent=1 // pred_fallthru
      _
    // Predicated region
    $region10: #{tpu_custom_call.1} parent=1 // pred_check
      _
    $region11: #{tpu_custom_call.1} parent=1 // pred_check_branch
      %34 = sbr.rel (0) target = $region13
    $region12: #{tpu_custom_call.1} parent=1 // pred_region
      %s36 = ssub.s32 128, 128
      %37 = vsyncadd [#allocation6], %s36
      %s38 = sshll.u32 [#allocation7], 4
      %s39 = int_to_ptr.vmem [resolvable:$true] %s38
      %44 = dma.hbm_to_vmem [thread:$0]  %s2, 128, %s39, [#allocation6], 64, 64, 4
    $region13: #{tpu_custom_call.1} parent=1 // pred_fallthru
      _
    // Predicated region
    $region14: #{tpu_custom_call.1} parent=1 // pred_check
      _
    $region15: #{tpu_custom_call.1} parent=1 // pred_check_branch
      %46 = sbr.rel (0) target = $region17
    $region16: #{tpu_custom_call.1} parent=1 // pred_region
      _
    $region17: #{tpu_custom_call.1} parent=1 // pred_fallthru
      _
    // Predicated region
    $region18: #{tpu_custom_call.1} parent=1 // pred_check
      _
    $region19: #{tpu_custom_call.1} parent=1 // pred_check_branch
      %48 = sbr.rel (0) target = $region21
    $region20: #{tpu_custom_call.1} parent=1 // pred_region
      _
    $region21: #{tpu_custom_call.1} parent=1 // pred_fallthru
      _
    // Predicated region
    $region22: #{tpu_custom_call.1} parent=1 // pred_check
      _
    $region23: #{tpu_custom_call.1} parent=1 // pred_check_branch
      %50 = sbr.rel (0) target = $region25
    $region24: #{tpu_custom_call.1} parent=1 // pred_region
      %51 = dma.done [#allocation3], 64
    $region25: #{tpu_custom_call.1} parent=1 // pred_fallthru
      _
    // Predicated region
    $region26: #{tpu_custom_call.1} parent=1 // pred_check
      _
    $region27: #{tpu_custom_call.1} parent=1 // pred_check_branch
      %53 = sbr.rel (0) target = $region29
    $region28: #{tpu_custom_call.1} parent=1 // pred_region
      %54 = dma.done [#allocation6], 64
    $region29: #{tpu_custom_call.1} parent=1 // pred_fallthru
      _
    // Predicated region
    $region30: #{tpu_custom_call.1} parent=1 // pred_check
      _
    $region31: #{tpu_custom_call.1} parent=1 // pred_check_branch
      %56 = sbr.rel (0) target = $region33
    $region32: #{tpu_custom_call.1} parent=1 // pred_region
      %57 = dma.done [#allocation6], 128
    $region33: #{tpu_custom_call.1} parent=1 // pred_fallthru
      _
    %v59 = vld [vmem:[#allocation2] sm:$0xf]
    %v60 = vld [vmem:[#allocation7] sm:$0xf]
    %v61 = vld [vmem:[#allocation7 + $0x4] sm:$0xf]
    %v62 = vld [vmem:[#allocation5] sm:$0xf]
    %v63 = vld [vmem:[%s3] sm:$0xf]
    %v64 = vld [vmem:[%s3 + $0x4] sm:$0xf]
    %v67 = vunpack.c.l.b16 %v63
    %v68 = vunpack.c.l.b16 %v64
    %v69 = vpack.c.b16 %v68, %v67
    %vm71 = vcmask 130048
    %v73 = vsel %vm71, %v62, 0
    %75 = vmatprep.subr.bf16.mxu0 0
    %76 = vmatpush1.bf16.msra.mxu0 %v69
    %77 = vmatprep.subr.bf16.mxu0 0
    %78 = vmatpush1.bf16.msra.mxu0 0
    %79 = vmatprep.subr.bf16.mxu0 0
    %80 = vmatpush1.bf16.msra.mxu0 0
    %81 = vmatprep.subr.bf16.mxu0 0
    %82 = vmatpush1.bf16.msra.mxu0 0
    %83 = vmatprep.subr.bf16.mxu0 0
    %84 = vmatpush1.bf16.msra.mxu0 0
    %85 = vmatprep.subr.bf16.mxu0 0
    %86 = vmatpush1.bf16.msra.mxu0 0
    %87 = vmatprep.subr.bf16.mxu0 0
    %88 = vmatpush1.bf16.msra.mxu0 0
    %89 = vmatprep.subr.bf16.mxu0 0
    %90 = vmatpush1.bf16.msra.mxu0 0
    %91 = vmatprep.subr.bf16.mxu0 0
    %92 = vmatpush1.bf16.msra.mxu0 0
    %93 = vmatprep.subr.bf16.mxu0 0
    %94 = vmatpush1.bf16.msra.mxu0 0
    %95 = vmatprep.subr.bf16.mxu0 0
    %96 = vmatpush1.bf16.msra.mxu0 0
    %97 = vmatprep.subr.bf16.mxu0 0
    %98 = vmatpush1.bf16.msra.mxu0 0
    %99 = vmatprep.subr.bf16.mxu0 0
    %100 = vmatpush1.bf16.msra.mxu0 0
    %101 = vmatprep.subr.bf16.mxu0 0
    %102 = vmatpush1.bf16.msra.mxu0 0
    %103 = vmatprep.subr.bf16.mxu0 0
    %104 = vmatpush1.bf16.msra.mxu0 0
    %105 = vmatprep.subr.bf16.mxu0 0
    %106 = vmatpush1.bf16.msra.mxu0 0
    %107 = vmatprep.mubr.bf16.mxu0 0
    %108 = vmatmul.mubr.bf16.gmra.mrb[0].mxu0 %v73
    %v109 = vpop.f32.mrb[0].mxu0
    %v110 = vadd.f32 0.0, %v109
    %v111 = vpop.f32.mrb[0].mxu0
    %v112 = vpop.f32.mrb[0].mxu0
    %v113 = vpop.f32.mrb[0].mxu0
    %114 = vdwg.mxu0
    %v117 = vunpack.c.l.b16 %v60
    %v118 = vunpack.c.l.b16 %v61
    %v119 = vpack.c.b16 %v118, %v117
    %v122 = vsel %vm71, %v59, 0
    %124 = vmatprep.subr.bf16.mxu0 0
    %125 = vmatpush1.bf16.msra.mxu0 %v119
    %126 = vmatprep.subr.bf16.mxu0 0
    %127 = vmatpush1.bf16.msra.mxu0 0
    %128 = vmatprep.subr.bf16.mxu0 0
    %129 = vmatpush1.bf16.msra.mxu0 0
    %130 = vmatprep.subr.bf16.mxu0 0
    %131 = vmatpush1.bf16.msra.mxu0 0
    %132 = vmatprep.subr.bf16.mxu0 0
    %133 = vmatpush1.bf16.msra.mxu0 0
    %134 = vmatprep.subr.bf16.mxu0 0
    %135 = vmatpush1.bf16.msra.mxu0 0
    %136 = vmatprep.subr.bf16.mxu0 0
    %137 = vmatpush1.bf16.msra.mxu0 0
    %138 = vmatprep.subr.bf16.mxu0 0
    %139 = vmatpush1.bf16.msra.mxu0 0
    %140 = vmatprep.subr.bf16.mxu0 0
    %141 = vmatpush1.bf16.msra.mxu0 0
    %142 = vmatprep.subr.bf16.mxu0 0
    %143 = vmatpush1.bf16.msra.mxu0 0
    %144 = vmatprep.subr.bf16.mxu0 0
    %145 = vmatpush1.bf16.msra.mxu0 0
    %146 = vmatprep.subr.bf16.mxu0 0
    %147 = vmatpush1.bf16.msra.mxu0 0
    %148 = vmatprep.subr.bf16.mxu0 0
    %149 = vmatpush1.bf16.msra.mxu0 0
    %150 = vmatprep.subr.bf16.mxu0 0
    %151 = vmatpush1.bf16.msra.mxu0 0
    %152 = vmatprep.subr.bf16.mxu0 0
    %153 = vmatpush1.bf16.msra.mxu0 0
    %154 = vmatprep.subr.bf16.mxu0 0
    %155 = vmatpush1.bf16.msra.mxu0 0
    %156 = vmatprep.mubr.bf16.mxu0 0
    %157 = vmatmul.mubr.bf16.gmra.mrb[0].mxu0 %v122
    %v158 = vpop.f32.mrb[0].mxu0
    %v159 = vadd.f32 %v110, %v158
    %v160 = vpop.f32.mrb[0].mxu0
    %v161 = vpop.f32.mrb[0].mxu0
    %v162 = vpop.f32.mrb[0].mxu0
    %163 = vdwg.mxu0
    %v164 = vld [vmem:[%s4] sm:$0x1]
    %v166 = vlaneseq
    %v167 = vshrl.u32 %v166, 7
    %v168 = vsub.s32 0, %v167
    %v169 = vrot.slane %v164, %v168
    %v171 = vadd.f32 %v159, %v169
    %172 = vst [vmem:[#allocation8] sm:$0xff] %v171
    // Predicated region
    $region34: #{tpu_custom_call.1} parent=1 // pred_check
      _
    $region35: #{tpu_custom_call.1} parent=1 // pred_check_branch
      %174 = sbr.rel (0) target = $region37
    $region36: #{tpu_custom_call.1} parent=1 // pred_region
      %s176 = ssub.s32 128, 128
      %177 = vsyncadd [#allocation4], %s176
      %s179 = sshll.u32 [#allocation8], 4
      %s180 = int_to_ptr.vmem [resolvable:$true] %s179
      %182 = dma.vmem_to_hbm [thread:$0]  %s180, 128, %s5, [#allocation4]
    $region37: #{tpu_custom_call.1} parent=1 // pred_fallthru
      _
    // Predicated region
    $region38: #{tpu_custom_call.1} parent=1 // pred_check
      _
    $region39: #{tpu_custom_call.1} parent=1 // pred_check_branch
      %184 = sbr.rel (0) target = $region41
    $region40: #{tpu_custom_call.1} parent=1 // pred_region
      %185 = dma.done [#allocation4], 128
    $region41: #{tpu_custom_call.1} parent=1 // pred_fallthru
      _
    %186 = vsyncpa [#allocation3], 1
    %187 = vsyncpa [#allocation6], 1
    %188 = vsyncpa [#allocation4], 1

</llo_original>
